<compile_context>
chip_gen: v6e
topology: v6e:2x2x1
jax: 0.10.0
libtpu: 0.0.40
codegen_flags: <defaults>
</compile_context>

<pallas_src>
import math
import functools

import jax
import jax.numpy as jnp
from jax.experimental import pallas as pl
from jax.experimental.pallas import tpu as pltpu

# ---- model hyper-parameters (synthetic, consistent with the module) ----
M = 8        # batch
DIM = 8      # data dimension (must be even for the coupling split)
D2 = DIM // 2
NH = 32      # hidden width of the s/t conditioner MLPs
K = 4        # number of flows in the chain

_LOG_2PI = math.log(2.0 * math.pi)


def _nf_kernel(x_ref, p1_ref, p2_ref, out_ref, *, num_flows):
    """Whole flow chain in one kernel invocation (no grid; everything in VMEM).

    p1_ref: (K, D2+1, 2*NH)  rows 0..D2-1 = [W1s | W1t], row D2 = [b1s | b1t]
    p2_ref: (K, 2*NH+1, 2*D2) rows 0..2NH-1 = blockdiag(W2s, W2t), last row = [b2s | b2t]
    out_ref: (m, out_w) lanes [k*dim:(k+1)*dim] = z_{k+1}; lane K*dim = log_det;
             lane K*dim+1 = prior_logprob; remaining lanes zero.
    """
    m, dim = x_ref.shape
    d2 = dim // 2
    two_nh = p2_ref.shape[1] - 1
    out_w = out_ref.shape[1]

    x = x_ref[...].astype(jnp.float32)
    lo = x[:, :d2]          # one-time split; halves carried separately from here on
    hi = x[:, d2:]

    log_det = jnp.zeros((m, 1), jnp.float32)
    pieces = []

    # num_flows is a static Python int -> fully unrolled chain.
    for k in range(num_flows):
        # parity 0: condition on lo, transform hi.  parity 1: the opposite.
        cond, trans = (lo, hi) if (k % 2 == 0) else (hi, lo)

        pk1 = p1_ref[k]                                   # (D2+1, 2NH)
        h = jnp.tanh(
            jnp.dot(cond, pk1[:d2, :], preferred_element_type=jnp.float32)
            + pk1[d2:d2 + 1, :])                          # (m, 2NH) = [h_s | h_t]

        pk2 = p2_ref[k]                                   # (2NH+1, 2D2)
        st = (jnp.dot(h, pk2[:two_nh, :], preferred_element_type=jnp.float32)
              + pk2[two_nh:two_nh + 1, :])                # (m, 2*D2) = [s | t]
        s = st[:, :d2]
        t = st[:, d2:]

        new_trans = jnp.exp(s) * trans + t
        if k % 2 == 0:
            hi = new_trans
        else:
            lo = new_trans

        log_det = log_det + jnp.sum(s, axis=1, keepdims=True)
        pieces.append(lo)
        pieces.append(hi)

    # MultivariateNormal(0, I) log_prob of z_K, then .view(m,-1).sum(1) (identity here).
    prior = (-0.5 * (jnp.sum(lo * lo, axis=1, keepdims=True)
                     + jnp.sum(hi * hi, axis=1, keepdims=True))
             - 0.5 * dim * _LOG_2PI)

    # Tail lanes: [log_det, prior, 0, 0, ...] built with selects (no width-1 concats).
    tail_w = out_w - num_flows * dim
    lane = jax.lax.broadcasted_iota(jnp.int32, (m, tail_w), 1)
    tail = (jnp.where(lane == 0, log_det, 0.0)
            + jnp.where(lane == 1, prior, 0.0))
    pieces.append(tail)

    # Single lane-dense (m, out_w) slab -> one unmasked store, one output DMA.
    out_ref[...] = jnp.concatenate(pieces, axis=1)


def fuse_params(params):
    """Pack the 8 per-flow parameter tensors into 2 lane-aligned blobs."""
    k, d2, nh = params["w1s"].shape

    # First layer: concatenate s/t conditioners along the output dim; bias as last row.
    w1 = jnp.concatenate([params["w1s"], params["w1t"]], axis=-1)   # (K, D2, 2NH)
    b1 = jnp.concatenate([params["b1s"], params["b1t"]], axis=-1)   # (K, 1, 2NH)
    p1 = jnp.concatenate([w1, b1], axis=1)                          # (K, D2+1, 2NH)

    # Second layer: block-diagonal so one matmul produces [s | t]; bias as last row.
    zeros = jnp.zeros((k, nh, d2), jnp.float32)
    w2 = jnp.concatenate(
        [jnp.concatenate([params["w2s"], zeros], axis=-1),
         jnp.concatenate([zeros, params["w2t"]], axis=-1)], axis=1)  # (K, 2NH, 2D2)
    b2 = jnp.concatenate([params["b2s"], params["b2t"]], axis=-1)    # (K, 1, 2D2)
    p2 = jnp.concatenate([w2, b2], axis=1)                           # (K, 2NH+1, 2D2)
    return p1, p2


def normalizing_flow_model_forward(x, params):
    """Returns (zs: list of K+1 arrays (m, dim), prior_logprob (m,), log_det (m,))."""
    m, dim = x.shape
    num_flows = params["w1s"].shape[0]
    p1, p2 = fuse_params(params)

    used = num_flows * dim + 2
    out_w = max(128, ((used + 127) // 128) * 128)   # lane-dense output width

    vmem = pl.BlockSpec(memory_space=pltpu.MemorySpace.VMEM)
    kernel = functools.partial(_nf_kernel, num_flows=num_flows)

    out = pl.pallas_call(
        kernel,
        out_shape=jax.ShapeDtypeStruct((m, out_w), jnp.float32),
        in_specs=[vmem, vmem, vmem],
        out_specs=vmem,
    )(x, p1, p2)

    # zs[0] is the input itself (not re-materialized by the kernel).
    zs = [x] + [out[:, k * dim:(k + 1) * dim] for k in range(num_flows)]
    log_det = out[:, num_flows * dim]
    prior_logprob = out[:, num_flows * dim + 1]
    return zs, prior_logprob, log_det


def init_params(key):
    """Deterministic PyTorch-Linear-style uniform(-1/sqrt(fan_in), 1/sqrt(fan_in)) init."""
    def lin(k, fan_in, shape):
        bound = 1.0 / math.sqrt(fan_in)
        return jax.random.uniform(k, shape, jnp.float32, -bound, bound)

    ks = jax.random.split(key, 8)
    return {
        # s-net: Linear(D2 -> NH), Linear(NH -> D2), stacked over K flows
        "w1s": lin(ks[0], D2, (K, D2, NH)),
        "b1s": lin(ks[1], D2, (K, 1, NH)),
        "w2s": lin(ks[2], NH, (K, NH, D2)),
        "b2s": lin(ks[3], NH, (K, 1, D2)),
        # t-net
        "w1t": lin(ks[4], D2, (K, D2, NH)),
        "b1t": lin(ks[5], D2, (K, 1, NH)),
        "w2t": lin(ks[6], NH, (K, NH, D2)),
        "b2t": lin(ks[7], NH, (K, 1, D2)),
    }


def _reference_forward(x, params):
    """Pure-JAX reference of the same flow chain (for a quick correctness check)."""
    zs = [x]
    log_det = jnp.zeros((x.shape[0],), jnp.float32)
    for k in range(K):
        x0, x1 = x[:, :D2], x[:, D2:]
        if k % 2:
            x0, x1 = x1, x0
        s = jnp.tanh(x0 @ params["w1s"][k] + params["b1s"][k][0]) @ params["w2s"][k] + params["b2s"][k][0]
        t = jnp.tanh(x0 @ params["w1t"][k] + params["b1t"][k][0]) @ params["w2t"][k] + params["b2t"][k][0]
        z0, z1 = x0, jnp.exp(s) * x1 + t
        if k % 2:
            z0, z1 = z1, z0
        x = jnp.concatenate([z0, z1], axis=1)
        log_det = log_det + jnp.sum(s, axis=1)
        zs.append(x)
    prior_lp = -0.5 * jnp.sum(x * x, axis=1) - 0.5 * DIM * _LOG_2PI
    return zs, prior_lp, log_det


if __name__ == "__main__":
    key = jax.random.PRNGKey(0)
    k_param, k_x = jax.random.split(key)
    params = init_params(k_param)
    x = jax.random.normal(k_x, (M, DIM), dtype=jnp.float32)

    zs, prior_logprob, log_det = normalizing_flow_model_forward(x, params)
    jax.block_until_ready((zs, prior_logprob, log_det))

    # sanity check against pure-JAX reference
    zs_ref, prior_ref, ld_ref = _reference_forward(x, params)
    for a, b in zip(zs, zs_ref):
        assert jnp.allclose(a, b, atol=1e-5), "zs mismatch"
    assert jnp.allclose(prior_logprob, prior_ref, atol=1e-5), "prior_logprob mismatch"
    assert jnp.allclose(log_det, ld_ref, atol=1e-5), "log_det mismatch"

    print("KERNEL_OK")
</pallas_src>

<mosaic_0001>
module attributes {stable_mosaic.version = 11 : i64} {
  func.func @_nf_kernel(%arg0: memref<8x8xf32, #tpu.memory_space<vmem>>, %arg1: memref<4x5x64xf32, #tpu.memory_space<vmem>>, %arg2: memref<4x65x8xf32, #tpu.memory_space<vmem>>, %arg3: memref<8x128xf32, #tpu.memory_space<vmem>>) attributes {dimension_semantics = [], scalar_prefetch = 0 : i64, scratch_operands = 0 : i64, tpu.core_type = #tpu.core_type<tc>} {
    %c0 = arith.constant 0 : index
    %c0_0 = arith.constant 0 : index
    %0 = vector.load %arg0[%c0, %c0_0] : memref<8x8xf32, #tpu.memory_space<vmem>>, vector<8x8xf32>
    %1 = vector.extract_strided_slice %0 {offsets = [0, 0], sizes = [8, 4], strides = [1, 1]} : vector<8x8xf32> to vector<8x4xf32>
    %2 = vector.extract_strided_slice %0 {offsets = [0, 4], sizes = [8, 4], strides = [1, 1]} : vector<8x8xf32> to vector<8x4xf32>
    %cst = arith.constant 0.000000e+00 : f32
    %3 = vector.broadcast %cst : f32 to vector<8x1xf32>
    %c0_1 = arith.constant 0 : index
    %c0_2 = arith.constant 0 : index
    %c0_3 = arith.constant 0 : index
    %4 = vector.load %arg1[%c0_1, %c0_2, %c0_3] : memref<4x5x64xf32, #tpu.memory_space<vmem>>, vector<1x5x64xf32>
    %5 = vector.shape_cast %4 : vector<1x5x64xf32> to vector<5x64xf32>
    %6 = vector.extract_strided_slice %5 {offsets = [0, 0], sizes = [4, 64], strides = [1, 1]} : vector<5x64xf32> to vector<4x64xf32>
    %cst_4 = arith.constant dense<0.000000e+00> : vector<8x64xf32>
    %7 = tpu.matmul %1, %6, %cst_4 {dimension_numbers = #tpu.dot_dimension_numbers<[1], [0], [0], [1], [0, 0, 1, 1], [], []>} : vector<8x4xf32>, vector<4x64xf32>, vector<8x64xf32> -> vector<8x64xf32>
    %8 = vector.extract_strided_slice %5 {offsets = [4, 0], sizes = [1, 64], strides = [1, 1]} : vector<5x64xf32> to vector<1x64xf32>
    %9 = vector.broadcast %8 : vector<1x64xf32> to vector<8x64xf32>
    %10 = arith.addf %7, %9 : vector<8x64xf32>
    %11 = math.tanh %10 : vector<8x64xf32>
    %c0_5 = arith.constant 0 : index
    %c0_6 = arith.constant 0 : index
    %c0_7 = arith.constant 0 : index
    %12 = vector.load %arg2[%c0_5, %c0_6, %c0_7] : memref<4x65x8xf32, #tpu.memory_space<vmem>>, vector<1x65x8xf32>
    %13 = vector.shape_cast %12 : vector<1x65x8xf32> to vector<65x8xf32>
    %14 = vector.extract_strided_slice %13 {offsets = [0, 0], sizes = [64, 8], strides = [1, 1]} : vector<65x8xf32> to vector<64x8xf32>
    %cst_8 = arith.constant dense<0.000000e+00> : vector<8x8xf32>
    %15 = tpu.matmul %11, %14, %cst_8 {dimension_numbers = #tpu.dot_dimension_numbers<[1], [0], [0], [1], [0, 0, 1, 1], [], []>} : vector<8x64xf32>, vector<64x8xf32>, vector<8x8xf32> -> vector<8x8xf32>
    %16 = vector.extract_strided_slice %13 {offsets = [64, 0], sizes = [1, 8], strides = [1, 1]} : vector<65x8xf32> to vector<1x8xf32>
    %17 = vector.broadcast %16 : vector<1x8xf32> to vector<8x8xf32>
    %18 = arith.addf %15, %17 : vector<8x8xf32>
    %19 = vector.extract_strided_slice %18 {offsets = [0, 0], sizes = [8, 4], strides = [1, 1]} : vector<8x8xf32> to vector<8x4xf32>
    %20 = vector.extract_strided_slice %18 {offsets = [0, 4], sizes = [8, 4], strides = [1, 1]} : vector<8x8xf32> to vector<8x4xf32>
    %21 = math.exp %19 : vector<8x4xf32>
    %22 = arith.mulf %21, %2 : vector<8x4xf32>
    %23 = arith.addf %22, %20 : vector<8x4xf32>
    %cst_9 = arith.constant dense<0.000000e+00> : vector<8xf32>
    %24 = vector.multi_reduction <add>, %19, %cst_9 [1] : vector<8x4xf32> to vector<8xf32>
    %25 = vector.shape_cast %24 : vector<8xf32> to vector<8x1xf32>
    %26 = arith.addf %3, %25 : vector<8x1xf32>
    %c1 = arith.constant 1 : index
    %c0_10 = arith.constant 0 : index
    %c0_11 = arith.constant 0 : index
    %27 = vector.load %arg1[%c1, %c0_10, %c0_11] : memref<4x5x64xf32, #tpu.memory_space<vmem>>, vector<1x5x64xf32>
    %28 = vector.shape_cast %27 : vector<1x5x64xf32> to vector<5x64xf32>
    %29 = vector.extract_strided_slice %28 {offsets = [0, 0], sizes = [4, 64], strides = [1, 1]} : vector<5x64xf32> to vector<4x64xf32>
    %cst_12 = arith.constant dense<0.000000e+00> : vector<8x64xf32>
    %30 = tpu.matmul %23, %29, %cst_12 {dimension_numbers = #tpu.dot_dimension_numbers<[1], [0], [0], [1], [0, 0, 1, 1], [], []>} : vector<8x4xf32>, vector<4x64xf32>, vector<8x64xf32> -> vector<8x64xf32>
    %31 = vector.extract_strided_slice %28 {offsets = [4, 0], sizes = [1, 64], strides = [1, 1]} : vector<5x64xf32> to vector<1x64xf32>
    %32 = vector.broadcast %31 : vector<1x64xf32> to vector<8x64xf32>
    %33 = arith.addf %30, %32 : vector<8x64xf32>
    %34 = math.tanh %33 : vector<8x64xf32>
    %c1_13 = arith.constant 1 : index
    %c0_14 = arith.constant 0 : index
    %c0_15 = arith.constant 0 : index
    %35 = vector.load %arg2[%c1_13, %c0_14, %c0_15] : memref<4x65x8xf32, #tpu.memory_space<vmem>>, vector<1x65x8xf32>
    %36 = vector.shape_cast %35 : vector<1x65x8xf32> to vector<65x8xf32>
    %37 = vector.extract_strided_slice %36 {offsets = [0, 0], sizes = [64, 8], strides = [1, 1]} : vector<65x8xf32> to vector<64x8xf32>
    %cst_16 = arith.constant dense<0.000000e+00> : vector<8x8xf32>
    %38 = tpu.matmul %34, %37, %cst_16 {dimension_numbers = #tpu.dot_dimension_numbers<[1], [0], [0], [1], [0, 0, 1, 1], [], []>} : vector<8x64xf32>, vector<64x8xf32>, vector<8x8xf32> -> vector<8x8xf32>
    %39 = vector.extract_strided_slice %36 {offsets = [64, 0], sizes = [1, 8], strides = [1, 1]} : vector<65x8xf32> to vector<1x8xf32>
    %40 = vector.broadcast %39 : vector<1x8xf32> to vector<8x8xf32>
    %41 = arith.addf %38, %40 : vector<8x8xf32>
    %42 = vector.extract_strided_slice %41 {offsets = [0, 0], sizes = [8, 4], strides = [1, 1]} : vector<8x8xf32> to vector<8x4xf32>
    %43 = vector.extract_strided_slice %41 {offsets = [0, 4], sizes = [8, 4], strides = [1, 1]} : vector<8x8xf32> to vector<8x4xf32>
    %44 = math.exp %42 : vector<8x4xf32>
    %45 = arith.mulf %44, %1 : vector<8x4xf32>
    %46 = arith.addf %45, %43 : vector<8x4xf32>
    %cst_17 = arith.constant dense<0.000000e+00> : vector<8xf32>
    %47 = vector.multi_reduction <add>, %42, %cst_17 [1] : vector<8x4xf32> to vector<8xf32>
    %48 = vector.shape_cast %47 : vector<8xf32> to vector<8x1xf32>
    %49 = arith.addf %26, %48 : vector<8x1xf32>
    %c2 = arith.constant 2 : index
    %c0_18 = arith.constant 0 : index
    %c0_19 = arith.constant 0 : index
    %50 = vector.load %arg1[%c2, %c0_18, %c0_19] : memref<4x5x64xf32, #tpu.memory_space<vmem>>, vector<1x5x64xf32>
    %51 = vector.shape_cast %50 : vector<1x5x64xf32> to vector<5x64xf32>
    %52 = vector.extract_strided_slice %51 {offsets = [0, 0], sizes = [4, 64], strides = [1, 1]} : vector<5x64xf32> to vector<4x64xf32>
    %cst_20 = arith.constant dense<0.000000e+00> : vector<8x64xf32>
    %53 = tpu.matmul %46, %52, %cst_20 {dimension_numbers = #tpu.dot_dimension_numbers<[1], [0], [0], [1], [0, 0, 1, 1], [], []>} : vector<8x4xf32>, vector<4x64xf32>, vector<8x64xf32> -> vector<8x64xf32>
    %54 = vector.extract_strided_slice %51 {offsets = [4, 0], sizes = [1, 64], strides = [1, 1]} : vector<5x64xf32> to vector<1x64xf32>
    %55 = vector.broadcast %54 : vector<1x64xf32> to vector<8x64xf32>
    %56 = arith.addf %53, %55 : vector<8x64xf32>
    %57 = math.tanh %56 : vector<8x64xf32>
    %c2_21 = arith.constant 2 : index
    %c0_22 = arith.constant 0 : index
    %c0_23 = arith.constant 0 : index
    %58 = vector.load %arg2[%c2_21, %c0_22, %c0_23] : memref<4x65x8xf32, #tpu.memory_space<vmem>>, vector<1x65x8xf32>
    %59 = vector.shape_cast %58 : vector<1x65x8xf32> to vector<65x8xf32>
    %60 = vector.extract_strided_slice %59 {offsets = [0, 0], sizes = [64, 8], strides = [1, 1]} : vector<65x8xf32> to vector<64x8xf32>
    %cst_24 = arith.constant dense<0.000000e+00> : vector<8x8xf32>
    %61 = tpu.matmul %57, %60, %cst_24 {dimension_numbers = #tpu.dot_dimension_numbers<[1], [0], [0], [1], [0, 0, 1, 1], [], []>} : vector<8x64xf32>, vector<64x8xf32>, vector<8x8xf32> -> vector<8x8xf32>
    %62 = vector.extract_strided_slice %59 {offsets = [64, 0], sizes = [1, 8], strides = [1, 1]} : vector<65x8xf32> to vector<1x8xf32>
    %63 = vector.broadcast %62 : vector<1x8xf32> to vector<8x8xf32>
    %64 = arith.addf %61, %63 : vector<8x8xf32>
    %65 = vector.extract_strided_slice %64 {offsets = [0, 0], sizes = [8, 4], strides = [1, 1]} : vector<8x8xf32> to vector<8x4xf32>
    %66 = vector.extract_strided_slice %64 {offsets = [0, 4], sizes = [8, 4], strides = [1, 1]} : vector<8x8xf32> to vector<8x4xf32>
    %67 = math.exp %65 : vector<8x4xf32>
    %68 = arith.mulf %67, %23 : vector<8x4xf32>
    %69 = arith.addf %68, %66 : vector<8x4xf32>
    %cst_25 = arith.constant dense<0.000000e+00> : vector<8xf32>
    %70 = vector.multi_reduction <add>, %65, %cst_25 [1] : vector<8x4xf32> to vector<8xf32>
    %71 = vector.shape_cast %70 : vector<8xf32> to vector<8x1xf32>
    %72 = arith.addf %49, %71 : vector<8x1xf32>
    %c3 = arith.constant 3 : index
    %c0_26 = arith.constant 0 : index
    %c0_27 = arith.constant 0 : index
    %73 = vector.load %arg1[%c3, %c0_26, %c0_27] : memref<4x5x64xf32, #tpu.memory_space<vmem>>, vector<1x5x64xf32>
    %74 = vector.shape_cast %73 : vector<1x5x64xf32> to vector<5x64xf32>
    %75 = vector.extract_strided_slice %74 {offsets = [0, 0], sizes = [4, 64], strides = [1, 1]} : vector<5x64xf32> to vector<4x64xf32>
    %cst_28 = arith.constant dense<0.000000e+00> : vector<8x64xf32>
    %76 = tpu.matmul %69, %75, %cst_28 {dimension_numbers = #tpu.dot_dimension_numbers<[1], [0], [0], [1], [0, 0, 1, 1], [], []>} : vector<8x4xf32>, vector<4x64xf32>, vector<8x64xf32> -> vector<8x64xf32>
    %77 = vector.extract_strided_slice %74 {offsets = [4, 0], sizes = [1, 64], strides = [1, 1]} : vector<5x64xf32> to vector<1x64xf32>
    %78 = vector.broadcast %77 : vector<1x64xf32> to vector<8x64xf32>
    %79 = arith.addf %76, %78 : vector<8x64xf32>
    %80 = math.tanh %79 : vector<8x64xf32>
    %c3_29 = arith.constant 3 : index
    %c0_30 = arith.constant 0 : index
    %c0_31 = arith.constant 0 : index
    %81 = vector.load %arg2[%c3_29, %c0_30, %c0_31] : memref<4x65x8xf32, #tpu.memory_space<vmem>>, vector<1x65x8xf32>
    %82 = vector.shape_cast %81 : vector<1x65x8xf32> to vector<65x8xf32>
    %83 = vector.extract_strided_slice %82 {offsets = [0, 0], sizes = [64, 8], strides = [1, 1]} : vector<65x8xf32> to vector<64x8xf32>
    %cst_32 = arith.constant dense<0.000000e+00> : vector<8x8xf32>
    %84 = tpu.matmul %80, %83, %cst_32 {dimension_numbers = #tpu.dot_dimension_numbers<[1], [0], [0], [1], [0, 0, 1, 1], [], []>} : vector<8x64xf32>, vector<64x8xf32>, vector<8x8xf32> -> vector<8x8xf32>
    %85 = vector.extract_strided_slice %82 {offsets = [64, 0], sizes = [1, 8], strides = [1, 1]} : vector<65x8xf32> to vector<1x8xf32>
    %86 = vector.broadcast %85 : vector<1x8xf32> to vector<8x8xf32>
    %87 = arith.addf %84, %86 : vector<8x8xf32>
    %88 = vector.extract_strided_slice %87 {offsets = [0, 0], sizes = [8, 4], strides = [1, 1]} : vector<8x8xf32> to vector<8x4xf32>
    %89 = vector.extract_strided_slice %87 {offsets = [0, 4], sizes = [8, 4], strides = [1, 1]} : vector<8x8xf32> to vector<8x4xf32>
    %90 = math.exp %88 : vector<8x4xf32>
    %91 = arith.mulf %90, %46 : vector<8x4xf32>
    %92 = arith.addf %91, %89 : vector<8x4xf32>
    %cst_33 = arith.constant dense<0.000000e+00> : vector<8xf32>
    %93 = vector.multi_reduction <add>, %88, %cst_33 [1] : vector<8x4xf32> to vector<8xf32>
    %94 = vector.shape_cast %93 : vector<8xf32> to vector<8x1xf32>
    %95 = arith.addf %72, %94 : vector<8x1xf32>
    %96 = arith.mulf %92, %92 : vector<8x4xf32>
    %cst_34 = arith.constant dense<0.000000e+00> : vector<8xf32>
    %97 = vector.multi_reduction <add>, %96, %cst_34 [1] : vector<8x4xf32> to vector<8xf32>
    %98 = vector.shape_cast %97 : vector<8xf32> to vector<8x1xf32>
    %99 = arith.mulf %69, %69 : vector<8x4xf32>
    %cst_35 = arith.constant dense<0.000000e+00> : vector<8xf32>
    %100 = vector.multi_reduction <add>, %99, %cst_35 [1] : vector<8x4xf32> to vector<8xf32>
    %101 = vector.shape_cast %100 : vector<8xf32> to vector<8x1xf32>
    %102 = arith.addf %98, %101 : vector<8x1xf32>
    %cst_36 = arith.constant -5.000000e-01 : f32
    %103 = vector.broadcast %cst_36 : f32 to vector<8x1xf32>
    %104 = arith.mulf %103, %102 : vector<8x1xf32>
    %cst_37 = arith.constant 7.35150814 : f32
    %105 = vector.broadcast %cst_37 : f32 to vector<8x1xf32>
    %106 = arith.subf %104, %105 : vector<8x1xf32>
    %107 = tpu.iota {dimensions = array<i32: 1>} : vector<8x96xi32>
    %c0_i32 = arith.constant 0 : i32
    %108 = vector.broadcast %c0_i32 : i32 to vector<8x96xi32>
    %109 = arith.cmpi eq, %107, %108 : vector<8x96xi32>
    %cst_38 = arith.constant 0.000000e+00 : f32
    %110 = vector.shape_cast %95 : vector<8x1xf32> to vector<8x1xf32>
    %111 = vector.broadcast %110 : vector<8x1xf32> to vector<8x96xf32>
    %112 = vector.broadcast %cst_38 : f32 to vector<8x96xf32>
    %113 = arith.select %109, %111, %112 : vector<8x96xi1>, vector<8x96xf32>
    %c1_i32 = arith.constant 1 : i32
    %114 = vector.broadcast %c1_i32 : i32 to vector<8x96xi32>
    %115 = arith.cmpi eq, %107, %114 : vector<8x96xi32>
    %cst_39 = arith.constant 0.000000e+00 : f32
    %116 = vector.shape_cast %106 : vector<8x1xf32> to vector<8x1xf32>
    %117 = vector.broadcast %116 : vector<8x1xf32> to vector<8x96xf32>
    %118 = vector.broadcast %cst_39 : f32 to vector<8x96xf32>
    %119 = arith.select %115, %117, %118 : vector<8x96xi1>, vector<8x96xf32>
    %120 = arith.addf %113, %119 : vector<8x96xf32>
    %121 = tpu.concatenate %1, %23, %46, %23, %46, %69, %92, %69, %120 in 1 : vector<8x4xf32>, vector<8x4xf32>, vector<8x4xf32>, vector<8x4xf32>, vector<8x4xf32>, vector<8x4xf32>, vector<8x4xf32>, vector<8x4xf32>, vector<8x96xf32> -> vector<8x128xf32>
    %c0_40 = arith.constant 0 : index
    %c0_41 = arith.constant 0 : index
    %122 = vector.load %arg3[%c0_40, %c0_41] : memref<8x128xf32, #tpu.memory_space<vmem>>, vector<8x128xf32>
    tpu.vector_store %arg3[%c0_40, %c0_41], %121 {strides = array<i32>} : memref<8x128xf32, #tpu.memory_space<vmem>>, vector<8x128xf32>,
    return
  }
}

</mosaic_0001>

<llo_original>
// kernel: tpu_custom_call.1
$region0: #{tpu_custom_call.1}
  #allocation0 [shape = 'u32[]', space=smem, size = 0x4, offset = 0x4, fixed_abs, tag = 'smem constant byte address 0x4 - core index']
  #allocation1 [shape = 'u32[144,128]{1,0:T(1,128)}', space=vmem, size = 0x12000, scoped, tag = 'internal scratch']
  %s0 = inlined_call_operand.vmem [shape: f32[8,8], index: 0, kind: input, shape index: {}]
  %s1 = inlined_call_operand.vmem [shape: f32[4,5,64], index: 1, kind: input, shape index: {}]
  %s2 = inlined_call_operand.vmem [shape: f32[4,65,8], index: 2, kind: input, shape index: {}]
  %s3 = inlined_call_operand.hbm [shape: f32[8,128], index: 3, kind: output, shape index: {}]
  %s4 = sld [smem:[#allocation0]]
  $region22: #{tpu_custom_call.1} parent=0
    _
  %s6 = ssub.s32 1, %s4
  %s7 = scalar_select 0, %s6, %s4
  $region1: #{tpu_custom_call.1} parent=0
    #allocation2 [shape = 'u8[4096]{0}', space=vmem, size = 0x1000, scoped, tag = 'output window, operand 0, single buffered']
    #allocation3 [shape = 's32[1]{0}', space=sflag, size = 0x4, scoped, tag = 'scoped memory for tpu_custom_call.1']
    %8 = vsyncpa [#allocation3], 0
    // Predicated region
    $region2: #{tpu_custom_call.1} parent=1 // pred_check
      _
    $region3: #{tpu_custom_call.1} parent=1 // pred_check_branch
      %10 = sbr.rel (0) target = $region5
    $region4: #{tpu_custom_call.1} parent=1 // pred_region
      _
    $region5: #{tpu_custom_call.1} parent=1 // pred_fallthru
      _
    // Predicated region
    $region6: #{tpu_custom_call.1} parent=1 // pred_check
      _
    $region7: #{tpu_custom_call.1} parent=1 // pred_check_branch
      %12 = sbr.rel (0) target = $region9
    $region8: #{tpu_custom_call.1} parent=1 // pred_region
      _
    $region9: #{tpu_custom_call.1} parent=1 // pred_fallthru
      _
    // Predicated region
    $region10: #{tpu_custom_call.1} parent=1 // pred_check
      _
    $region11: #{tpu_custom_call.1} parent=1 // pred_check_branch
      %14 = sbr.rel (0) target = $region13
    $region12: #{tpu_custom_call.1} parent=1 // pred_region
      _
    $region13: #{tpu_custom_call.1} parent=1 // pred_fallthru
      _
    %v15 = vld [vmem:[%s0] sm:$0xff]
    %v16 = vld [vmem:[%s1] sm:$0x1f]
    %v17 = vlaneseq
    %v18 = vshrl.u32 %v17, 7
    %v19 = vsub.s32 4, %v18
    %v20 = vrot.slane %v16, %v19
    %vm21 = vcmask 31744
    %v23 = vsel %vm21, %v15, 0
    %vm25 = vcmask 1043456
    %v27 = vsel %vm25, %v16, 0
    %29 = vmatprep.subr.mxu0 0.0
    %30 = vmatpush1.msra.mxu0 0.0
    %31 = vmatprep.subr.mxu0 0.0
    %32 = vmatpush1.msra.mxu0 0.0
    %33 = vmatprep.subr.mxu0 0.0
    %34 = vmatpush1.msra.mxu0 0.0
    %35 = vmatprep.subr.mxu0 0.0
    %36 = vmatpush1.msra.mxu0 0.0
    %37 = vmatprep.subr.mxu0 0.0
    %38 = vmatpush1.msra.mxu0 0.0
    %39 = vmatprep.subr.mxu0 0.0
    %40 = vmatpush1.msra.mxu0 0.0
    %41 = vmatprep.subr.mxu0 0.0
    %42 = vmatpush1.msra.mxu0 0.0
    %43 = vmatprep.subr.mxu0 0.0
    %44 = vmatpush1.msra.mxu0 0.0
    %45 = vmatprep.subr.mxu0 0.0
    %46 = vmatpush1.msra.mxu0 0.0
    %47 = vmatprep.subr.mxu0 0.0
    %48 = vmatpush1.msra.mxu0 0.0
    %49 = vmatprep.subr.mxu0 0.0
    %50 = vmatpush1.msra.mxu0 0.0
    %51 = vmatprep.subr.mxu0 0.0
    %52 = vmatpush1.msra.mxu0 0.0
    %53 = vmatprep.subr.mxu0 0.0
    %54 = vmatpush1.msra.mxu0 0.0
    %55 = vmatprep.subr.mxu0 0.0
    %56 = vmatpush1.msra.mxu0 0.0
    %57 = vmatprep.subr.mxu0 0.0
    %58 = vmatpush1.msra.mxu0 0.0
    %59 = vmatprep.subr.mxu0 0.0
    %60 = vmatpush1.msra.mxu0 %v27
    %61 = vmatprep.subr.mxu0 0.0
    %62 = vmatpush2.msra.mxu0 0.0
    %63 = vmatprep.subr.mxu0 0.0
    %64 = vmatpush2.msra.mxu0 0.0
    %65 = vmatprep.subr.mxu0 0.0
    %66 = vmatpush2.msra.mxu0 0.0
    %67 = vmatprep.subr.mxu0 0.0
    %68 = vmatpush2.msra.mxu0 0.0
    %69 = vmatprep.subr.mxu0 0.0
    %70 = vmatpush2.msra.mxu0 0.0
    %71 = vmatprep.subr.mxu0 0.0
    %72 = vmatpush2.msra.mxu0 0.0
    %73 = vmatprep.subr.mxu0 0.0
    %74 = vmatpush2.msra.mxu0 0.0
    %75 = vmatprep.subr.mxu0 0.0
    %76 = vmatpush2.msra.mxu0 0.0
    %77 = vmatprep.subr.mxu0 0.0
    %78 = vmatpush2.msra.mxu0 0.0
    %79 = vmatprep.subr.mxu0 0.0
    %80 = vmatpush2.msra.mxu0 0.0
    %81 = vmatprep.subr.mxu0 0.0
    %82 = vmatpush2.msra.mxu0 0.0
    %83 = vmatprep.subr.mxu0 0.0
    %84 = vmatpush2.msra.mxu0 0.0
    %85 = vmatprep.subr.mxu0 0.0
    %86 = vmatpush2.msra.mxu0 0.0
    %87 = vmatprep.subr.mxu0 0.0
    %88 = vmatpush2.msra.mxu0 0.0
    %89 = vmatprep.subr.mxu0 0.0
    %90 = vmatpush2.msra.mxu0 0.0
    %91 = vmatprep.subr.mxu0 0.0
    %92 = vmatpush2.msra.mxu0 0.0
    %93 = vmatprep.mubr.f32.mxu0 0.0
    %94 = vmatmul.mubr.f32.gmra.mxu0 %v23
    %v95 = vpop.f32.mrf.mxu0
    %v96 = vadd.f32 %v20, %v95
    %v97 = vpop.f32.mrf.mxu0
    %98 = vdwg.mxu0
    %v99 = vtanh.pop %v96
    %v100 = vld [vmem:[%s2] sm:$0xff]
    %v101 = vld [vmem:[%s2 + $0x8] sm:$0xff]
    %v102 = vld [vmem:[%s2 + $0x10] sm:$0xff]
    %v103 = vld [vmem:[%s2 + $0x18] sm:$0xff]
    %v104 = vld [vmem:[%s2 + $0x20] sm:$0xff]
    %v105 = vld [vmem:[%s2 + $0x28] sm:$0xff]
    %v106 = vld [vmem:[%s2 + $0x30] sm:$0xff]
    %v107 = vld [vmem:[%s2 + $0x38] sm:$0xff]
    %v108 = vld [vmem:[%s2 + $0x40] sm:$0x1]
    %v109 = vlaneseq
    %v110 = vshrl.u32 %v109, 7
    %v111 = vsub.s32 0, %v110
    %v112 = vrot.slane %v108, %v111
    %vm113 = vcmask 523264
    %v115 = vsel %vm113, %v99, 0
    %117 = vmatprep.subr.mxu0 0.0
    %118 = vmatpush1.msra.mxu0 0.0
    %119 = vmatprep.subr.mxu0 0.0
    %120 = vmatpush1.msra.mxu0 0.0
    %121 = vmatprep.subr.mxu0 0.0
    %122 = vmatpush1.msra.mxu0 0.0
    %123 = vmatprep.subr.mxu0 0.0
    %124 = vmatpush1.msra.mxu0 0.0
    %125 = vmatprep.subr.mxu0 0.0
    %126 = vmatpush1.msra.mxu0 0.0
    %127 = vmatprep.subr.mxu0 0.0
    %128 = vmatpush1.msra.mxu0 0.0
    %129 = vmatprep.subr.mxu0 0.0
    %130 = vmatpush1.msra.mxu0 0.0
    %131 = vmatprep.subr.mxu0 0.0
    %132 = vmatpush1.msra.mxu0 0.0
    %133 = vmatprep.subr.mxu0 0.0
    %134 = vmatpush1.msra.mxu0 %v107
    %135 = vmatprep.subr.mxu0 0.0
    %136 = vmatpush1.msra.mxu0 %v106
    %137 = vmatprep.subr.mxu0 0.0
    %138 = vmatpush1.msra.mxu0 %v105
    %139 = vmatprep.subr.mxu0 0.0
    %140 = vmatpush1.msra.mxu0 %v104
    %141 = vmatprep.subr.mxu0 0.0
    %142 = vmatpush1.msra.mxu0 %v103
    %143 = vmatprep.subr.mxu0 0.0
    %144 = vmatpush1.msra.mxu0 %v102
    %145 = vmatprep.subr.mxu0 0.0
    %146 = vmatpush1.msra.mxu0 %v101
    %147 = vmatprep.subr.mxu0 0.0
    %148 = vmatpush1.msra.mxu0 %v100
    %149 = vmatprep.subr.mxu0 0.0
    %150 = vmatpush2.msra.mxu0 0.0
    %151 = vmatprep.subr.mxu0 0.0
    %152 = vmatpush2.msra.mxu0 0.0
    %153 = vmatprep.subr.mxu0 0.0
    %154 = vmatpush2.msra.mxu0 0.0
    %155 = vmatprep.subr.mxu0 0.0
    %156 = vmatpush2.msra.mxu0 0.0
    %157 = vmatprep.subr.mxu0 0.0
    %158 = vmatpush2.msra.mxu0 0.0
    %159 = vmatprep.subr.mxu0 0.0
    %160 = vmatpush2.msra.mxu0 0.0
    %161 = vmatprep.subr.mxu0 0.0
    %162 = vmatpush2.msra.mxu0 0.0
    %163 = vmatprep.subr.mxu0 0.0
    %164 = vmatpush2.msra.mxu0 0.0
    %165 = vmatprep.subr.mxu0 0.0
    %166 = vmatpush2.msra.mxu0 0.0
    %167 = vmatprep.subr.mxu0 0.0
    %168 = vmatpush2.msra.mxu0 0.0
    %169 = vmatprep.subr.mxu0 0.0
    %170 = vmatpush2.msra.mxu0 0.0
    %171 = vmatprep.subr.mxu0 0.0
    %172 = vmatpush2.msra.mxu0 0.0
    %173 = vmatprep.subr.mxu0 0.0
    %174 = vmatpush2.msra.mxu0 0.0
    %175 = vmatprep.subr.mxu0 0.0
    %176 = vmatpush2.msra.mxu0 0.0
    %177 = vmatprep.subr.mxu0 0.0
    %178 = vmatpush2.msra.mxu0 0.0
    %179 = vmatprep.subr.mxu0 0.0
    %180 = vmatpush2.msra.mxu0 0.0
    %181 = vmatprep.mubr.f32.mxu0 0.0
    %182 = vmatmul.mubr.f32.gmra.mxu0 %v115
    %v183 = vpop.f32.mrf.mxu0
    %v184 = vadd.f32 %v112, %v183
    %v185 = vpop.f32.mrf.mxu0
    %186 = vdwg.mxu0
    %v187 = vmul.f32 %v184, 1.442695
    %v188 = vpow.pop %v187
    %189 = vrot.lane.b32.xlu0 %v15, 124
    %v190 = vpop.permute.xlu0 %189
    %v192 = vmul.f32 %v188, %v190
    %194 = vrot.lane.b32.xlu0 %v184, 124
    %v195 = vpop.permute.xlu0 %194
    %v197 = vadd.f32 %v192, %v195
    %v198 = vsel %vm21, %v184, 0.0
    %199 = vadd.xlane.f32.xlu0 %v198
    %v200 = vpop.xlane.xlu0 %199
    %v201 = vadd.f32 %v200, 0.0
    %s202 = scalar_lea.vmem %s1, 8
    %v203 = vld [vmem:[%s202] sm:$0x1f]
    %v204 = vlaneseq
    %v205 = vshrl.u32 %v204, 7
    %v206 = vsub.s32 4, %v205
    %v207 = vrot.slane %v203, %v206
    %v209 = vsel %vm21, %v197, 0
    %v212 = vsel %vm25, %v203, 0
    %214 = vmatprep.subr.mxu0 0.0
    %215 = vmatpush1.msra.mxu0 0.0
    %216 = vmatprep.subr.mxu0 0.0
    %217 = vmatpush1.msra.mxu0 0.0
    %218 = vmatprep.subr.mxu0 0.0
    %219 = vmatpush1.msra.mxu0 0.0
    %220 = vmatprep.subr.mxu0 0.0
    %221 = vmatpush1.msra.mxu0 0.0
    %222 = vmatprep.subr.mxu0 0.0
    %223 = vmatpush1.msra.mxu0 0.0
    %224 = vmatprep.subr.mxu0 0.0
    %225 = vmatpush1.msra.mxu0 0.0
    %226 = vmatprep.subr.mxu0 0.0
    %227 = vmatpush1.msra.mxu0 0.0
    %228 = vmatprep.subr.mxu0 0.0
    %229 = vmatpush1.msra.mxu0 0.0
    %230 = vmatprep.subr.mxu0 0.0
    %231 = vmatpush1.msra.mxu0 0.0
    %232 = vmatprep.subr.mxu0 0.0
    %233 = vmatpush1.msra.mxu0 0.0
    %234 = vmatprep.subr.mxu0 0.0
    %235 = vmatpush1.msra.mxu0 0.0
    %236 = vmatprep.subr.mxu0 0.0
    %237 = vmatpush1.msra.mxu0 0.0
    %238 = vmatprep.subr.mxu0 0.0
    %239 = vmatpush1.msra.mxu0 0.0
    %240 = vmatprep.subr.mxu0 0.0
    %241 = vmatpush1.msra.mxu0 0.0
    %242 = vmatprep.subr.mxu0 0.0
    %243 = vmatpush1.msra.mxu0 0.0
    %244 = vmatprep.subr.mxu0 0.0
    %245 = vmatpush1.msra.mxu0 %v212
    %246 = vmatprep.subr.mxu0 0.0
    %247 = vmatpush2.msra.mxu0 0.0
    %248 = vmatprep.subr.mxu0 0.0
    %249 = vmatpush2.msra.mxu0 0.0
    %250 = vmatprep.subr.mxu0 0.0
    %251 = vmatpush2.msra.mxu0 0.0
    %252 = vmatprep.subr.mxu0 0.0
    %253 = vmatpush2.msra.mxu0 0.0
    %254 = vmatprep.subr.mxu0 0.0
    %255 = vmatpush2.msra.mxu0 0.0
    %256 = vmatprep.subr.mxu0 0.0
    %257 = vmatpush2.msra.mxu0 0.0
    %258 = vmatprep.subr.mxu0 0.0
    %259 = vmatpush2.msra.mxu0 0.0
    %260 = vmatprep.subr.mxu0 0.0
    %261 = vmatpush2.msra.mxu0 0.0
    %262 = vmatprep.subr.mxu0 0.0
    %263 = vmatpush2.msra.mxu0 0.0
    %264 = vmatprep.subr.mxu0 0.0
    %265 = vmatpush2.msra.mxu0 0.0
    %266 = vmatprep.subr.mxu0 0.0
    %267 = vmatpush2.msra.mxu0 0.0
    %268 = vmatprep.subr.mxu0 0.0
    %269 = vmatpush2.msra.mxu0 0.0
    %270 = vmatprep.subr.mxu0 0.0
    %271 = vmatpush2.msra.mxu0 0.0
    %272 = vmatprep.subr.mxu0 0.0
    %273 = vmatpush2.msra.mxu0 0.0
    %274 = vmatprep.subr.mxu0 0.0
    %275 = vmatpush2.msra.mxu0 0.0
    %276 = vmatprep.subr.mxu0 0.0
    %277 = vmatpush2.msra.mxu0 0.0
    %278 = vmatprep.mubr.f32.mxu0 0.0
    %279 = vmatmul.mubr.f32.gmra.mxu0 %v209
    %v280 = vpop.f32.mrf.mxu0
    %v281 = vadd.f32 %v207, %v280
    %v282 = vpop.f32.mrf.mxu0
    %283 = vdwg.mxu0
    %v284 = vtanh.pop %v281
    %s285 = scalar_lea.vmem %s2, 72
    %v286 = vld [vmem:[%s285] sm:$0xff]
    %v287 = vld [vmem:[%s285 + $0x8] sm:$0xff]
    %v288 = vld [vmem:[%s285 + $0x10] sm:$0xff]
    %v289 = vld [vmem:[%s285 + $0x18] sm:$0xff]
    %v290 = vld [vmem:[%s285 + $0x20] sm:$0xff]
    %v291 = vld [vmem:[%s285 + $0x28] sm:$0xff]
    %v292 = vld [vmem:[%s285 + $0x30] sm:$0xff]
    %v293 = vld [vmem:[%s285 + $0x38] sm:$0xff]
    %v294 = vld [vmem:[%s285 + $0x40] sm:$0x1]
    %v295 = vlaneseq
    %v296 = vshrl.u32 %v295, 7
    %v297 = vsub.s32 0, %v296
    %v298 = vrot.slane %v294, %v297
    %v300 = vsel %vm113, %v284, 0
    %302 = vmatprep.subr.mxu0 0.0
    %303 = vmatpush1.msra.mxu0 0.0
    %304 = vmatprep.subr.mxu0 0.0
    %305 = vmatpush1.msra.mxu0 0.0
    %306 = vmatprep.subr.mxu0 0.0
    %307 = vmatpush1.msra.mxu0 0.0
    %308 = vmatprep.subr.mxu0 0.0
    %309 = vmatpush1.msra.mxu0 0.0
    %310 = vmatprep.subr.mxu0 0.0
    %311 = vmatpush1.msra.mxu0 0.0
    %312 = vmatprep.subr.mxu0 0.0
    %313 = vmatpush1.msra.mxu0 0.0
    %314 = vmatprep.subr.mxu0 0.0
    %315 = vmatpush1.msra.mxu0 0.0
    %316 = vmatprep.subr.mxu0 0.0
    %317 = vmatpush1.msra.mxu0 0.0
    %318 = vmatprep.subr.mxu0 0.0
    %319 = vmatpush1.msra.mxu0 %v293
    %320 = vmatprep.subr.mxu0 0.0
    %321 = vmatpush1.msra.mxu0 %v292
    %322 = vmatprep.subr.mxu0 0.0
    %323 = vmatpush1.msra.mxu0 %v291
    %324 = vmatprep.subr.mxu0 0.0
    %325 = vmatpush1.msra.mxu0 %v290
    %326 = vmatprep.subr.mxu0 0.0
    %327 = vmatpush1.msra.mxu0 %v289
    %328 = vmatprep.subr.mxu0 0.0
    %329 = vmatpush1.msra.mxu0 %v288
    %330 = vmatprep.subr.mxu0 0.0
    %331 = vmatpush1.msra.mxu0 %v287
    %332 = vmatprep.subr.mxu0 0.0
    %333 = vmatpush1.msra.mxu0 %v286
    %334 = vmatprep.subr.mxu0 0.0
    %335 = vmatpush2.msra.mxu0 0.0
    %336 = vmatprep.subr.mxu0 0.0
    %337 = vmatpush2.msra.mxu0 0.0
    %338 = vmatprep.subr.mxu0 0.0
    %339 = vmatpush2.msra.mxu0 0.0
    %340 = vmatprep.subr.mxu0 0.0
    %341 = vmatpush2.msra.mxu0 0.0
    %342 = vmatprep.subr.mxu0 0.0
    %343 = vmatpush2.msra.mxu0 0.0
    %344 = vmatprep.subr.mxu0 0.0
    %345 = vmatpush2.msra.mxu0 0.0
    %346 = vmatprep.subr.mxu0 0.0
    %347 = vmatpush2.msra.mxu0 0.0
    %348 = vmatprep.subr.mxu0 0.0
    %349 = vmatpush2.msra.mxu0 0.0
    %350 = vmatprep.subr.mxu0 0.0
    %351 = vmatpush2.msra.mxu0 0.0
    %352 = vmatprep.subr.mxu0 0.0
    %353 = vmatpush2.msra.mxu0 0.0
    %354 = vmatprep.subr.mxu0 0.0
    %355 = vmatpush2.msra.mxu0 0.0
    %356 = vmatprep.subr.mxu0 0.0
    %357 = vmatpush2.msra.mxu0 0.0
    %358 = vmatprep.subr.mxu0 0.0
    %359 = vmatpush2.msra.mxu0 0.0
    %360 = vmatprep.subr.mxu0 0.0
    %361 = vmatpush2.msra.mxu0 0.0
    %362 = vmatprep.subr.mxu0 0.0
    %363 = vmatpush2.msra.mxu0 0.0
    %364 = vmatprep.subr.mxu0 0.0
    %365 = vmatpush2.msra.mxu0 0.0
    %366 = vmatprep.mubr.f32.mxu0 0.0
    %367 = vmatmul.mubr.f32.gmra.mxu0 %v300
    %v368 = vpop.f32.mrf.mxu0
    %v369 = vadd.f32 %v298, %v368
    %v370 = vpop.f32.mrf.mxu0
    %371 = vdwg.mxu0
    %v372 = vmul.f32 %v369, 1.442695
    %v373 = vpow.pop %v372
    %v374 = vmul.f32 %v373, %v15
    %376 = vrot.lane.b32.xlu0 %v369, 124
    %v377 = vpop.permute.xlu0 %376
    %v379 = vadd.f32 %v374, %v377
    %v380 = vsel %vm21, %v369, 0.0
    %381 = vadd.xlane.f32.xlu0 %v380
    %v382 = vpop.xlane.xlu0 %381
    %v383 = vadd.f32 %v201, %v382
    %s384 = scalar_lea.vmem %s1, 16
    %v385 = vld [vmem:[%s384] sm:$0x1f]
    %v386 = vlaneseq
    %v387 = vshrl.u32 %v386, 7
    %v388 = vsub.s32 4, %v387
    %v389 = vrot.slane %v385, %v388
    %v391 = vsel %vm21, %v379, 0
    %v394 = vsel %vm25, %v385, 0
    %396 = vmatprep.subr.mxu0 0.0
    %397 = vmatpush1.msra.mxu0 0.0
    %398 = vmatprep.subr.mxu0 0.0
    %399 = vmatpush1.msra.mxu0 0.0
    %400 = vmatprep.subr.mxu0 0.0
    %401 = vmatpush1.msra.mxu0 0.0
    %402 = vmatprep.subr.mxu0 0.0
    %403 = vmatpush1.msra.mxu0 0.0
    %404 = vmatprep.subr.mxu0 0.0
    %405 = vmatpush1.msra.mxu0 0.0
    %406 = vmatprep.subr.mxu0 0.0
    %407 = vmatpush1.msra.mxu0 0.0
    %408 = vmatprep.subr.mxu0 0.0
    %409 = vmatpush1.msra.mxu0 0.0
    %410 = vmatprep.subr.mxu0 0.0
    %411 = vmatpush1.msra.mxu0 0.0
    %412 = vmatprep.subr.mxu0 0.0
    %413 = vmatpush1.msra.mxu0 0.0
    %414 = vmatprep.subr.mxu0 0.0
    %415 = vmatpush1.msra.mxu0 0.0
    %416 = vmatprep.subr.mxu0 0.0
    %417 = vmatpush1.msra.mxu0 0.0
    %418 = vmatprep.subr.mxu0 0.0
    %419 = vmatpush1.msra.mxu0 0.0
    %420 = vmatprep.subr.mxu0 0.0
    %421 = vmatpush1.msra.mxu0 0.0
    %422 = vmatprep.subr.mxu0 0.0
    %423 = vmatpush1.msra.mxu0 0.0
    %424 = vmatprep.subr.mxu0 0.0
    %425 = vmatpush1.msra.mxu0 0.0
    %426 = vmatprep.subr.mxu0 0.0
    %427 = vmatpush1.msra.mxu0 %v394
    %428 = vmatprep.subr.mxu0 0.0
    %429 = vmatpush2.msra.mxu0 0.0
    %430 = vmatprep.subr.mxu0 0.0
    %431 = vmatpush2.msra.mxu0 0.0
    %432 = vmatprep.subr.mxu0 0.0
    %433 = vmatpush2.msra.mxu0 0.0
    %434 = vmatprep.subr.mxu0 0.0
    %435 = vmatpush2.msra.mxu0 0.0
    %436 = vmatprep.subr.mxu0 0.0
    %437 = vmatpush2.msra.mxu0 0.0
    %438 = vmatprep.subr.mxu0 0.0
    %439 = vmatpush2.msra.mxu0 0.0
    %440 = vmatprep.subr.mxu0 0.0
    %441 = vmatpush2.msra.mxu0 0.0
    %442 = vmatprep.subr.mxu0 0.0
    %443 = vmatpush2.msra.mxu0 0.0
    %444 = vmatprep.subr.mxu0 0.0
    %445 = vmatpush2.msra.mxu0 0.0
    %446 = vmatprep.subr.mxu0 0.0
    %447 = vmatpush2.msra.mxu0 0.0
    %448 = vmatprep.subr.mxu0 0.0
    %449 = vmatpush2.msra.mxu0 0.0
    %450 = vmatprep.subr.mxu0 0.0
    %451 = vmatpush2.msra.mxu0 0.0
    %452 = vmatprep.subr.mxu0 0.0
    %453 = vmatpush2.msra.mxu0 0.0
    %454 = vmatprep.subr.mxu0 0.0
    %455 = vmatpush2.msra.mxu0 0.0
    %456 = vmatprep.subr.mxu0 0.0
    %457 = vmatpush2.msra.mxu0 0.0
    %458 = vmatprep.subr.mxu0 0.0
    %459 = vmatpush2.msra.mxu0 0.0
    %460 = vmatprep.mubr.f32.mxu0 0.0
    %461 = vmatmul.mubr.f32.gmra.mxu0 %v391
    %v462 = vpop.f32.mrf.mxu0
    %v463 = vadd.f32 %v389, %v462
    %v464 = vpop.f32.mrf.mxu0
    %465 = vdwg.mxu0
    %v466 = vtanh.pop %v463
    %s467 = scalar_lea.vmem %s2, 144
    %v468 = vld [vmem:[%s467] sm:$0xff]
    %v469 = vld [vmem:[%s467 + $0x8] sm:$0xff]
    %v470 = vld [vmem:[%s467 + $0x10] sm:$0xff]
    %v471 = vld [vmem:[%s467 + $0x18] sm:$0xff]
    %v472 = vld [vmem:[%s467 + $0x20] sm:$0xff]
    %v473 = vld [vmem:[%s467 + $0x28] sm:$0xff]
    %v474 = vld [vmem:[%s467 + $0x30] sm:$0xff]
    %v475 = vld [vmem:[%s467 + $0x38] sm:$0xff]
    %v476 = vld [vmem:[%s467 + $0x40] sm:$0x1]
    %v477 = vlaneseq
    %v478 = vshrl.u32 %v477, 7
    %v479 = vsub.s32 0, %v478
    %v480 = vrot.slane %v476, %v479
    %v482 = vsel %vm113, %v466, 0
    %484 = vmatprep.subr.mxu0 0.0
    %485 = vmatpush1.msra.mxu0 0.0
    %486 = vmatprep.subr.mxu0 0.0
    %487 = vmatpush1.msra.mxu0 0.0
    %488 = vmatprep.subr.mxu0 0.0
    %489 = vmatpush1.msra.mxu0 0.0
    %490 = vmatprep.subr.mxu0 0.0
    %491 = vmatpush1.msra.mxu0 0.0
    %492 = vmatprep.subr.mxu0 0.0
    %493 = vmatpush1.msra.mxu0 0.0
    %494 = vmatprep.subr.mxu0 0.0
    %495 = vmatpush1.msra.mxu0 0.0
    %496 = vmatprep.subr.mxu0 0.0
    %497 = vmatpush1.msra.mxu0 0.0
    %498 = vmatprep.subr.mxu0 0.0
    %499 = vmatpush1.msra.mxu0 0.0
    %500 = vmatprep.subr.mxu0 0.0
    %501 = vmatpush1.msra.mxu0 %v475
    %502 = vmatprep.subr.mxu0 0.0
    %503 = vmatpush1.msra.mxu0 %v474
    %504 = vmatprep.subr.mxu0 0.0
    %505 = vmatpush1.msra.mxu0 %v473
    %506 = vmatprep.subr.mxu0 0.0
    %507 = vmatpush1.msra.mxu0 %v472
    %508 = vmatprep.subr.mxu0 0.0
    %509 = vmatpush1.msra.mxu0 %v471
    %510 = vmatprep.subr.mxu0 0.0
    %511 = vmatpush1.msra.mxu0 %v470
    %512 = vmatprep.subr.mxu0 0.0
    %513 = vmatpush1.msra.mxu0 %v469
    %514 = vmatprep.subr.mxu0 0.0
    %515 = vmatpush1.msra.mxu0 %v468
    %516 = vmatprep.subr.mxu0 0.0
    %517 = vmatpush2.msra.mxu0 0.0
    %518 = vmatprep.subr.mxu0 0.0
    %519 = vmatpush2.msra.mxu0 0.0
    %520 = vmatprep.subr.mxu0 0.0
    %521 = vmatpush2.msra.mxu0 0.0
    %522 = vmatprep.subr.mxu0 0.0
    %523 = vmatpush2.msra.mxu0 0.0
    %524 = vmatprep.subr.mxu0 0.0
    %525 = vmatpush2.msra.mxu0 0.0
    %526 = vmatprep.subr.mxu0 0.0
    %527 = vmatpush2.msra.mxu0 0.0
    %528 = vmatprep.subr.mxu0 0.0
    %529 = vmatpush2.msra.mxu0 0.0
    %530 = vmatprep.subr.mxu0 0.0
    %531 = vmatpush2.msra.mxu0 0.0
    %532 = vmatprep.subr.mxu0 0.0
    %533 = vmatpush2.msra.mxu0 0.0
    %534 = vmatprep.subr.mxu0 0.0
    %535 = vmatpush2.msra.mxu0 0.0
    %536 = vmatprep.subr.mxu0 0.0
    %537 = vmatpush2.msra.mxu0 0.0
    %538 = vmatprep.subr.mxu0 0.0
    %539 = vmatpush2.msra.mxu0 0.0
    %540 = vmatprep.subr.mxu0 0.0
    %541 = vmatpush2.msra.mxu0 0.0
    %542 = vmatprep.subr.mxu0 0.0
    %543 = vmatpush2.msra.mxu0 0.0
    %544 = vmatprep.subr.mxu0 0.0
    %545 = vmatpush2.msra.mxu0 0.0
    %546 = vmatprep.subr.mxu0 0.0
    %547 = vmatpush2.msra.mxu0 0.0
    %548 = vmatprep.mubr.f32.mxu0 0.0
    %549 = vmatmul.mubr.f32.gmra.mxu0 %v482
    %v550 = vpop.f32.mrf.mxu0
    %v551 = vadd.f32 %v480, %v550
    %v552 = vpop.f32.mrf.mxu0
    %553 = vdwg.mxu0
    %v554 = vmul.f32 %v551, 1.442695
    %v555 = vpow.pop %v554
    %v556 = vmul.f32 %v555, %v197
    %558 = vrot.lane.b32.xlu0 %v551, 124
    %v559 = vpop.permute.xlu0 %558
    %v561 = vadd.f32 %v556, %v559
    %v562 = vsel %vm21, %v551, 0.0
    %563 = vadd.xlane.f32.xlu0 %v562
    %v564 = vpop.xlane.xlu0 %563
    %v565 = vadd.f32 %v383, %v564
    %s566 = scalar_lea.vmem %s1, 24
    %v567 = vld [vmem:[%s566] sm:$0x1f]
    %v568 = vlaneseq
    %v569 = vshrl.u32 %v568, 7
    %v570 = vsub.s32 4, %v569
    %v571 = vrot.slane %v567, %v570
    %v573 = vsel %vm21, %v561, 0
    %v576 = vsel %vm25, %v567, 0
    %578 = vmatprep.subr.mxu0 0.0
    %579 = vmatpush1.msra.mxu0 0.0
    %580 = vmatprep.subr.mxu0 0.0
    %581 = vmatpush1.msra.mxu0 0.0
    %582 = vmatprep.subr.mxu0 0.0
    %583 = vmatpush1.msra.mxu0 0.0
    %584 = vmatprep.subr.mxu0 0.0
    %585 = vmatpush1.msra.mxu0 0.0
    %586 = vmatprep.subr.mxu0 0.0
    %587 = vmatpush1.msra.mxu0 0.0
    %588 = vmatprep.subr.mxu0 0.0
    %589 = vmatpush1.msra.mxu0 0.0
    %590 = vmatprep.subr.mxu0 0.0
    %591 = vmatpush1.msra.mxu0 0.0
    %592 = vmatprep.subr.mxu0 0.0
    %593 = vmatpush1.msra.mxu0 0.0
    %594 = vmatprep.subr.mxu0 0.0
    %595 = vmatpush1.msra.mxu0 0.0
    %596 = vmatprep.subr.mxu0 0.0
    %597 = vmatpush1.msra.mxu0 0.0
    %598 = vmatprep.subr.mxu0 0.0
    %599 = vmatpush1.msra.mxu0 0.0
    %600 = vmatprep.subr.mxu0 0.0
    %601 = vmatpush1.msra.mxu0 0.0
    %602 = vmatprep.subr.mxu0 0.0
    %603 = vmatpush1.msra.mxu0 0.0
    %604 = vmatprep.subr.mxu0 0.0
    %605 = vmatpush1.msra.mxu0 0.0
    %606 = vmatprep.subr.mxu0 0.0
    %607 = vmatpush1.msra.mxu0 0.0
    %608 = vmatprep.subr.mxu0 0.0
    %609 = vmatpush1.msra.mxu0 %v576
    %610 = vmatprep.subr.mxu0 0.0
    %611 = vmatpush2.msra.mxu0 0.0
    %612 = vmatprep.subr.mxu0 0.0
    %613 = vmatpush2.msra.mxu0 0.0
    %614 = vmatprep.subr.mxu0 0.0
    %615 = vmatpush2.msra.mxu0 0.0
    %616 = vmatprep.subr.mxu0 0.0
    %617 = vmatpush2.msra.mxu0 0.0
    %618 = vmatprep.subr.mxu0 0.0
    %619 = vmatpush2.msra.mxu0 0.0
    %620 = vmatprep.subr.mxu0 0.0
    %621 = vmatpush2.msra.mxu0 0.0
    %622 = vmatprep.subr.mxu0 0.0
    %623 = vmatpush2.msra.mxu0 0.0
    %624 = vmatprep.subr.mxu0 0.0
    %625 = vmatpush2.msra.mxu0 0.0
    %626 = vmatprep.subr.mxu0 0.0
    %627 = vmatpush2.msra.mxu0 0.0
    %628 = vmatprep.subr.mxu0 0.0
    %629 = vmatpush2.msra.mxu0 0.0
    %630 = vmatprep.subr.mxu0 0.0
    %631 = vmatpush2.msra.mxu0 0.0
    %632 = vmatprep.subr.mxu0 0.0
    %633 = vmatpush2.msra.mxu0 0.0
    %634 = vmatprep.subr.mxu0 0.0
    %635 = vmatpush2.msra.mxu0 0.0
    %636 = vmatprep.subr.mxu0 0.0
    %637 = vmatpush2.msra.mxu0 0.0
    %638 = vmatprep.subr.mxu0 0.0
    %639 = vmatpush2.msra.mxu0 0.0
    %640 = vmatprep.subr.mxu0 0.0
    %641 = vmatpush2.msra.mxu0 0.0
    %642 = vmatprep.mubr.f32.mxu0 0.0
    %643 = vmatmul.mubr.f32.gmra.mxu0 %v573
    %v644 = vpop.f32.mrf.mxu0
    %v645 = vadd.f32 %v571, %v644
    %v646 = vpop.f32.mrf.mxu0
    %647 = vdwg.mxu0
    %v648 = vtanh.pop %v645
    %s649 = scalar_lea.vmem %s2, 216
    %v650 = vld [vmem:[%s649] sm:$0xff]
    %v651 = vld [vmem:[%s649 + $0x8] sm:$0xff]
    %v652 = vld [vmem:[%s649 + $0x10] sm:$0xff]
    %v653 = vld [vmem:[%s649 + $0x18] sm:$0xff]
    %v654 = vld [vmem:[%s649 + $0x20] sm:$0xff]
    %v655 = vld [vmem:[%s649 + $0x28] sm:$0xff]
    %v656 = vld [vmem:[%s649 + $0x30] sm:$0xff]
    %v657 = vld [vmem:[%s649 + $0x38] sm:$0xff]
    %v658 = vld [vmem:[%s649 + $0x40] sm:$0x1]
    %v659 = vlaneseq
    %v660 = vshrl.u32 %v659, 7
    %v661 = vsub.s32 0, %v660
    %v662 = vrot.slane %v658, %v661
    %v664 = vsel %vm113, %v648, 0
    %666 = vmatprep.subr.mxu0 0.0
    %667 = vmatpush1.msra.mxu0 0.0
    %668 = vmatprep.subr.mxu0 0.0
    %669 = vmatpush1.msra.mxu0 0.0
    %670 = vmatprep.subr.mxu0 0.0
    %671 = vmatpush1.msra.mxu0 0.0
    %672 = vmatprep.subr.mxu0 0.0
    %673 = vmatpush1.msra.mxu0 0.0
    %674 = vmatprep.subr.mxu0 0.0
    %675 = vmatpush1.msra.mxu0 0.0
    %676 = vmatprep.subr.mxu0 0.0
    %677 = vmatpush1.msra.mxu0 0.0
    %678 = vmatprep.subr.mxu0 0.0
    %679 = vmatpush1.msra.mxu0 0.0
    %680 = vmatprep.subr.mxu0 0.0
    %681 = vmatpush1.msra.mxu0 0.0
    %682 = vmatprep.subr.mxu0 0.0
    %683 = vmatpush1.msra.mxu0 %v657
    %684 = vmatprep.subr.mxu0 0.0
    %685 = vmatpush1.msra.mxu0 %v656
    %686 = vmatprep.subr.mxu0 0.0
    %687 = vmatpush1.msra.mxu0 %v655
    %688 = vmatprep.subr.mxu0 0.0
    %689 = vmatpush1.msra.mxu0 %v654
    %690 = vmatprep.subr.mxu0 0.0
    %691 = vmatpush1.msra.mxu0 %v653
    %692 = vmatprep.subr.mxu0 0.0
    %693 = vmatpush1.msra.mxu0 %v652
    %694 = vmatprep.subr.mxu0 0.0
    %695 = vmatpush1.msra.mxu0 %v651
    %696 = vmatprep.subr.mxu0 0.0
    %697 = vmatpush1.msra.mxu0 %v650
    %698 = vmatprep.subr.mxu0 0.0
    %699 = vmatpush2.msra.mxu0 0.0
    %700 = vmatprep.subr.mxu0 0.0
    %701 = vmatpush2.msra.mxu0 0.0
    %702 = vmatprep.subr.mxu0 0.0
    %703 = vmatpush2.msra.mxu0 0.0
    %704 = vmatprep.subr.mxu0 0.0
    %705 = vmatpush2.msra.mxu0 0.0
    %706 = vmatprep.subr.mxu0 0.0
    %707 = vmatpush2.msra.mxu0 0.0
    %708 = vmatprep.subr.mxu0 0.0
    %709 = vmatpush2.msra.mxu0 0.0
    %710 = vmatprep.subr.mxu0 0.0
    %711 = vmatpush2.msra.mxu0 0.0
    %712 = vmatprep.subr.mxu0 0.0
    %713 = vmatpush2.msra.mxu0 0.0
    %714 = vmatprep.subr.mxu0 0.0
    %715 = vmatpush2.msra.mxu0 0.0
    %716 = vmatprep.subr.mxu0 0.0
    %717 = vmatpush2.msra.mxu0 0.0
    %718 = vmatprep.subr.mxu0 0.0
    %719 = vmatpush2.msra.mxu0 0.0
    %720 = vmatprep.subr.mxu0 0.0
    %721 = vmatpush2.msra.mxu0 0.0
    %722 = vmatprep.subr.mxu0 0.0
    %723 = vmatpush2.msra.mxu0 0.0
    %724 = vmatprep.subr.mxu0 0.0
    %725 = vmatpush2.msra.mxu0 0.0
    %726 = vmatprep.subr.mxu0 0.0
    %727 = vmatpush2.msra.mxu0 0.0
    %728 = vmatprep.subr.mxu0 0.0
    %729 = vmatpush2.msra.mxu0 0.0
    %730 = vmatprep.mubr.f32.mxu0 0.0
    %731 = vmatmul.mubr.f32.gmra.mxu0 %v664
    %v732 = vpop.f32.mrf.mxu0
    %v733 = vadd.f32 %v662, %v732
    %v734 = vpop.f32.mrf.mxu0
    %735 = vdwg.mxu0
    %v736 = vmul.f32 %v733, 1.442695
    %v737 = vpow.pop %v736
    %v738 = vmul.f32 %v737, %v379
    %740 = vrot.lane.b32.xlu0 %v733, 124
    %v741 = vpop.permute.xlu0 %740
    %v743 = vadd.f32 %v738, %v741
    %v744 = vsel %vm21, %v733, 0.0
    %745 = vadd.xlane.f32.xlu0 %v744
    %v746 = vpop.xlane.xlu0 %745
    %v747 = vadd.f32 %v565, %v746
    %v748 = vmul.f32 %v743, %v743
    %v749 = vsel %vm21, %v748, 0.0
    %750 = vadd.xlane.f32.xlu0 %v749
    %v751 = vpop.xlane.xlu0 %750
    %v752 = vmul.f32 %v561, %v561
    %v753 = vsel %vm21, %v752, 0.0
    %754 = vadd.xlane.f32.xlu0 %v753
    %v755 = vpop.xlane.xlu0 %754
    %v756 = vadd.f32 %v751, %v755
    %v757 = vmul.f32 %v756, -0.5
    %v758 = vsub.f32 %v757, 7.351508
    %v759 = vlaneseq
    %v760 = vand.u32 %v759, 127
    %vm761 = vcmp.eq.s32.totalorder %v760, 0
    %v762 = vsel %vm761, %v747, 0.0
    %vm763 = vcmp.eq.s32.totalorder %v760, 1
    %v764 = vsel %vm763, %v758, 0.0
    %v765 = vadd.f32 %v762, %v764
    %766 = vrot.lane.b32.xlu0 %v197, 4
    %v767 = vpop.permute.xlu0 %766
    %769 = vrot.lane.b32.xlu0 %v379, 8
    %v770 = vpop.permute.xlu0 %769
    %772 = vrot.lane.b32.xlu0 %v197, 12
    %v773 = vpop.permute.xlu0 %772
    %775 = vrot.lane.b32.xlu0 %v379, 16
    %v776 = vpop.permute.xlu0 %775
    %778 = vrot.lane.b32.xlu0 %v561, 20
    %v779 = vpop.permute.xlu0 %778
    %782 = vrot.lane.b32.xlu0 %v743, 24
    %v783 = vpop.permute.xlu0 %782
    %785 = vrot.lane.b32.xlu0 %v561, 28
    %v786 = vpop.permute.xlu0 %785
    %789 = vrot.lane.b32.xlu0 %v765, 32
    %v790 = vpop.permute.xlu0 %789
    %v792 = vsel %vm21, %v15, %v767
    %vm793 = vcmask 64512
    %v794 = vsel %vm793, %v792, %v770
    %vm795 = vcmask 97280
    %v796 = vsel %vm795, %v794, %v773
    %vm797 = vcmask 130048
    %v798 = vsel %vm797, %v796, %v776
    %vm799 = vcmask 162816
    %v800 = vsel %vm799, %v798, %v779
    %vm801 = vcmask 195584
    %v802 = vsel %vm801, %v800, %v783
    %vm803 = vcmask 228352
    %v804 = vsel %vm803, %v802, %v786
    %vm805 = vcmask 261120
    %v806 = vsel %vm805, %v804, %v790
    %807 = vst [vmem:[#allocation2] sm:$0xff] %v806
    // Predicated region
    $region14: #{tpu_custom_call.1} parent=1 // pred_check
      _
    $region15: #{tpu_custom_call.1} parent=1 // pred_check_branch
      %809 = sbr.rel (0) target = $region17
    $region16: #{tpu_custom_call.1} parent=1 // pred_region
      %s811 = ssub.s32 128, 128
      %812 = vsyncadd [#allocation3], %s811
      %s814 = sshll.u32 [#allocation2], 4
      %s815 = int_to_ptr.vmem [resolvable:$true] %s814
      %817 = dma.vmem_to_hbm [thread:$0]  %s815, 128, %s3, [#allocation3]
    $region17: #{tpu_custom_call.1} parent=1 // pred_fallthru
      _
    // Predicated region
    $region18: #{tpu_custom_call.1} parent=1 // pred_check
      _
    $region19: #{tpu_custom_call.1} parent=1 // pred_check_branch
      %819 = sbr.rel (0) target = $region21
    $region20: #{tpu_custom_call.1} parent=1 // pred_region
      %820 = dma.done [#allocation3], 128
    $region21: #{tpu_custom_call.1} parent=1 // pred_fallthru
      _
    %821 = vsyncpa [#allocation3], 1

</llo_original>
